<compile_context>
chip_gen: v5e
topology: v5e:2x2
jax: 0.10.0
libtpu: 0.0.40
codegen_flags: <defaults>
</compile_context>

<pallas_src>
import jax
import jax.numpy as jnp
from jax.experimental import pallas as pl
from jax.experimental.pallas import tpu as pltpu

EPS = 1e-5
TM = 128     # output-row tile (multiple of 8)
TK = 128     # reduction tile  (multiple of 128, lane aligned)
LANE = 128   # output lane width: Cout padded up to this


# ---------------------------------------------------------------------------
# Pallas kernels: tiled matmul with f32 accumulator, fused bias / residual /
# ReLU epilogue.  grid = (M/TM, K/TK); K is the last ("arbitrary") axis.
# ---------------------------------------------------------------------------
def _mm_bias_relu_kernel(p_ref, w_ref, b_ref, o_ref, acc_ref):
    # out = relu(P @ W + bias)     (conv+BN, incl. fused projection shortcut)
    k = pl.program_id(1)

    @pl.when(k == 0)
    def _():
        acc_ref[...] = jnp.zeros_like(acc_ref)

    acc_ref[...] += jnp.dot(p_ref[...], w_ref[...],
                            preferred_element_type=jnp.float32)

    @pl.when(k == pl.num_programs(1) - 1)
    def _():
        o_ref[...] = jnp.maximum(acc_ref[...] + b_ref[...], 0.0).astype(o_ref.dtype)


def _mm_bias_add_relu_kernel(p_ref, w_ref, b_ref, r_ref, o_ref, acc_ref):
    # out = relu(P @ W + bias + residual)     (identity-shortcut path)
    k = pl.program_id(1)

    @pl.when(k == 0)
    def _():
        acc_ref[...] = jnp.zeros_like(acc_ref)

    acc_ref[...] += jnp.dot(p_ref[...], w_ref[...],
                            preferred_element_type=jnp.float32)

    @pl.when(k == pl.num_programs(1) - 1)
    def _():
        o_ref[...] = jnp.maximum(
            acc_ref[...] + b_ref[...] + r_ref[...].astype(jnp.float32),
            0.0).astype(o_ref.dtype)


def _fused_matmul(p, w, bias, residual=None, out_dtype=jnp.float32):
    """relu(p @ w + bias [+ residual]).

    p:        [M_pad, K_pad] bf16   (M_pad % TM == 0, K_pad % TK == 0)
    w:        [K_pad, N_pad] bf16   (N_pad % 128 == 0)
    bias:     [1, N_pad]     f32
    residual: [M_pad, N_pad] f32 or None
    """
    M, K = p.shape
    _, N = w.shape
    grid = (M // TM, K // TK)

    in_specs = [
        pl.BlockSpec((TM, TK), lambda i, k: (i, k)),
        pl.BlockSpec((TK, N), lambda i, k: (k, 0)),
        pl.BlockSpec((1, N), lambda i, k: (0, 0)),
    ]
    args = [p, w, bias]
    if residual is None:
        kernel = _mm_bias_relu_kernel
    else:
        kernel = _mm_bias_add_relu_kernel
        in_specs.append(pl.BlockSpec((TM, N), lambda i, k: (i, 0)))
        args.append(residual)

    return pl.pallas_call(
        kernel,
        out_shape=jax.ShapeDtypeStruct((M, N), out_dtype),
        grid=grid,
        in_specs=in_specs,
        out_specs=pl.BlockSpec((TM, N), lambda i, k: (i, 0)),
        scratch_shapes=[pltpu.VMEM((TM, N), jnp.float32)],
        compiler_params=pltpu.CompilerParams(
            dimension_semantics=("parallel", "arbitrary"),
            vmem_limit_bytes=32 * 1024 * 1024),
    )(*args)


# ---------------------------------------------------------------------------
# JAX glue: padding, im2col, BN folding, weight re-layout
# ---------------------------------------------------------------------------
def _pad_axis(x, axis, mult):
    pad = (-x.shape[axis]) % mult
    if pad == 0:
        return x
    widths = [(0, 0)] * x.ndim
    widths[axis] = (0, pad)
    return jnp.pad(x, widths)


def _im2col_3x3(x_nhwc, stride):
    """[N,H,W,C] -> bf16 patches [N*Ho*Wo, 9*C] (pad=1), plus Ho, Wo."""
    x_nhwc = x_nhwc.astype(jnp.bfloat16)
    N, H, W, C = x_nhwc.shape
    xp = jnp.pad(x_nhwc, ((0, 0), (1, 1), (1, 1), (0, 0)))
    Ho = (H + 2 - 3) // stride + 1
    Wo = (W + 2 - 3) // stride + 1
    cols = []
    for dy in range(3):
        for dx in range(3):
            cols.append(xp[:,
                           dy:dy + (Ho - 1) * stride + 1:stride,
                           dx:dx + (Wo - 1) * stride + 1:stride, :])
    p = jnp.concatenate(cols, axis=-1)               # [N, Ho, Wo, 9*C]
    return p.reshape(N * Ho * Wo, 9 * C), Ho, Wo


def _fold_bn(gamma, beta, mean, var):
    scale = (gamma / jnp.sqrt(var + EPS)).astype(jnp.float32)
    shift = (beta - mean * scale).astype(jnp.float32)
    return scale, shift


def _fold_weight(w_oihw, scale):
    """OIHW conv weight -> [kh*kw*Cin, Cout] matmul weight with BN scale folded."""
    Cout = w_oihw.shape[0]
    wm = jnp.transpose(w_oihw, (2, 3, 1, 0)).reshape(-1, Cout).astype(jnp.float32)
    return wm * scale[None, :]


def basic_block_forward(x_nchw, params, stride):
    x = jnp.transpose(x_nchw, (0, 2, 3, 1)).astype(jnp.float32)   # NHWC
    N, H, W, Cin = x.shape
    Cout = params["w1"].shape[0]

    # ---- conv1 + bn1 + relu (scale folded into weights, bf16 MXU) ----------
    s1, sh1 = _fold_bn(params["g1"], params["b1"], params["m1"], params["v1"])
    w1m = _fold_weight(params["w1"], s1)                          # [9*Cin, Cout]
    p1, Ho, Wo = _im2col_3x3(x, stride)                           # [M, 9*Cin] bf16
    M = N * Ho * Wo

    p1 = _pad_axis(_pad_axis(p1, 0, TM), 1, TK)
    w1m = _pad_axis(_pad_axis(w1m, 0, TK), 1, LANE).astype(jnp.bfloat16)
    b1 = _pad_axis(sh1[None, :], 1, LANE)

    y1 = _fused_matmul(p1, w1m, b1, out_dtype=jnp.bfloat16)       # [M_pad, N_pad]
    y1_nhwc = y1[:M, :Cout].reshape(N, Ho, Wo, Cout)

    # ---- conv2 + bn2 (+ shortcut) + relu ------------------------------------
    s2, sh2 = _fold_bn(params["g2"], params["b2"], params["m2"], params["v2"])
    w2m = _fold_weight(params["w2"], s2)                          # [9*Cout, Cout]
    p2, _, _ = _im2col_3x3(y1_nhwc, 1)                            # [M, 9*Cout] bf16

    if "ws" in params:
        # Projection shortcut: fuse the 1x1 conv + BN into the same matmul
        # along K and sum the two BN shifts into one bias.
        ss, shs = _fold_bn(params["gs"], params["bs"], params["ms"], params["vs"])
        wsm = _fold_weight(params["ws"], ss)                      # [Cin, Cout]
        xs = x[:, ::stride, ::stride, :].reshape(M, Cin).astype(jnp.bfloat16)
        p_cat = jnp.concatenate([p2, xs], axis=1)                 # [M, 9*Cout+Cin]
        w_cat = jnp.concatenate([w2m, wsm], axis=0)
        bias = (sh2 + shs)[None, :]

        p_cat = _pad_axis(_pad_axis(p_cat, 0, TM), 1, TK)
        w_cat = _pad_axis(_pad_axis(w_cat, 0, TK), 1, LANE).astype(jnp.bfloat16)
        bias = _pad_axis(bias, 1, LANE)
        out = _fused_matmul(p_cat, w_cat, bias)
    else:
        # Identity shortcut is only defined for stride == 1 and Cin == Cout.
        assert stride == 1 and Cin == Cout, \
            "identity shortcut requires stride == 1 and in_planes == out_planes"
        resid = _pad_axis(_pad_axis(x.reshape(M, Cout), 0, TM), 1, LANE)
        p2 = _pad_axis(_pad_axis(p2, 0, TM), 1, TK)
        w2m = _pad_axis(_pad_axis(w2m, 0, TK), 1, LANE).astype(jnp.bfloat16)
        b2 = _pad_axis(sh2[None, :], 1, LANE)
        out = _fused_matmul(p2, w2m, b2, residual=resid)

    out = out[:M, :Cout].reshape(N, Ho, Wo, Cout)
    return jnp.transpose(out, (0, 3, 1, 2))                       # NCHW


# ---------------------------------------------------------------------------
# Pure-JAX reference (f32) + deterministic param init
# ---------------------------------------------------------------------------
def _ref_forward(x, params, stride):
    def conv(x, w, s, p):
        return jax.lax.conv_general_dilated(
            x, w, (s, s), [(p, p), (p, p)],
            dimension_numbers=("NCHW", "OIHW", "NCHW"),
            precision=jax.lax.Precision.HIGHEST)

    def bn(y, g, b, m, v):
        g, b, m, v = [t[None, :, None, None] for t in (g, b, m, v)]
        return (y - m) / jnp.sqrt(v + EPS) * g + b

    out = jax.nn.relu(bn(conv(x, params["w1"], stride, 1),
                         params["g1"], params["b1"], params["m1"], params["v1"]))
    out = bn(conv(out, params["w2"], 1, 1),
             params["g2"], params["b2"], params["m2"], params["v2"])
    if "ws" in params:
        sc = bn(conv(x, params["ws"], stride, 0),
                params["gs"], params["bs"], params["ms"], params["vs"])
    else:
        sc = x
    return jax.nn.relu(out + sc)


def init_params(key, in_planes, out_planes, stride):
    ks = jax.random.split(key, 16)

    def nrm(k, shape, scale=0.1):
        return scale * jax.random.normal(k, shape, jnp.float32)

    p = {
        "w1": nrm(ks[0], (out_planes, in_planes, 3, 3)),
        "g1": 1.0 + nrm(ks[1], (out_planes,)), "b1": nrm(ks[2], (out_planes,)),
        "m1": nrm(ks[3], (out_planes,)), "v1": 1.0 + jnp.abs(nrm(ks[4], (out_planes,))),
        "w2": nrm(ks[5], (out_planes, out_planes, 3, 3)),
        "g2": 1.0 + nrm(ks[6], (out_planes,)), "b2": nrm(ks[7], (out_planes,)),
        "m2": nrm(ks[8], (out_planes,)), "v2": 1.0 + jnp.abs(nrm(ks[9], (out_planes,))),
    }
    if in_planes != out_planes or stride != 1:
        p.update({
            "ws": nrm(ks[10], (out_planes, in_planes, 1, 1)),
            "gs": 1.0 + nrm(ks[11], (out_planes,)), "bs": nrm(ks[12], (out_planes,)),
            "ms": nrm(ks[13], (out_planes,)), "vs": 1.0 + jnp.abs(nrm(ks[14], (out_planes,))),
        })
    return p


if __name__ == "__main__":
    root = jax.random.PRNGKey(0)
    k_x1, k_p1, k_x2, k_p2 = jax.random.split(root, 4)

    # Case 1: projection shortcut (in_planes != out_planes, stride=2)
    N, Cin, H, W, Cout, stride = 2, 4, 16, 16, 8, 2
    x1 = jax.random.normal(k_x1, (N, Cin, H, W), jnp.float32)
    p1 = init_params(k_p1, Cin, Cout, stride)
    out1 = jax.block_until_ready(basic_block_forward(x1, p1, stride))
    ref1 = _ref_forward(x1, p1, stride)
    assert out1.shape == (N, Cout, H // stride, W // stride)
    assert jnp.allclose(out1, ref1, atol=5e-2, rtol=5e-2), \
        float(jnp.max(jnp.abs(out1 - ref1)))

    # Case 2: identity shortcut (in_planes == out_planes, stride=1)
    x2 = jax.random.normal(k_x2, (2, 8, 8, 8), jnp.float32)
    p2 = init_params(k_p2, 8, 8, 1)
    out2 = jax.block_until_ready(basic_block_forward(x2, p2, 1))
    ref2 = _ref_forward(x2, p2, 1)
    assert out2.shape == (2, 8, 8, 8)
    assert jnp.allclose(out2, ref2, atol=5e-2, rtol=5e-2), \
        float(jnp.max(jnp.abs(out2 - ref2)))

    print("KERNEL_OK")
</pallas_src>

<mosaic_0001>
module attributes {stable_mosaic.version = 11 : i64} {
  func.func @_mm_bias_relu_kernel(%arg0: i32, %arg1: i32, %arg2: memref<128x128xbf16, #tpu.memory_space<vmem>>, %arg3: memref<128x128xbf16, #tpu.memory_space<vmem>>, %arg4: memref<1x128xf32, #tpu.memory_space<vmem>>, %arg5: memref<128x128xbf16, #tpu.memory_space<vmem>>, %arg6: memref<128x128xf32, #tpu.memory_space<vmem>>) attributes {dimension_semantics = [#tpu.dimension_semantics<parallel>, #tpu.dimension_semantics<arbitrary>], iteration_bounds = array<i64: 1, 1>, scalar_prefetch = 0 : i64, scratch_operands = 1 : i64, tpu.core_type = #tpu.core_type<tc>, window_params = [{transform_indices = @transform_0, window_bounds = array<i64: 128, 128>}, {transform_indices = @transform_1, window_bounds = array<i64: 128, 128>}, {pipeline_mode = #tpu.pipeline_mode<synchronous>, transform_indices = @transform_2, window_bounds = array<i64: 1, 128>}, {transform_indices = @transform_3, window_bounds = array<i64: 128, 128>}]} {
    %c0_i32 = arith.constant 0 : i32
    %0 = arith.cmpi eq, %arg1, %c0_i32 : i32
    %1 = arith.extui %0 : i1 to i32
    %c0_i32_0 = arith.constant 0 : i32
    %2 = arith.cmpi ne, %1, %c0_i32_0 : i32
    scf.if %2 {
      %cst_10 = arith.constant 0.000000e+00 : f32
      %12 = vector.broadcast %cst_10 : f32 to vector<128x128xf32>
      %c0_11 = arith.constant 0 : index
      %c0_12 = arith.constant 0 : index
      %13 = vector.load %arg6[%c0_11, %c0_12] : memref<128x128xf32, #tpu.memory_space<vmem>>, vector<128x128xf32>
      tpu.vector_store %arg6[%c0_11, %c0_12], %12 {strides = array<i32>} : memref<128x128xf32, #tpu.memory_space<vmem>>, vector<128x128xf32>,
    } else {
    }
    %c0 = arith.constant 0 : index
    %c0_1 = arith.constant 0 : index
    %3 = vector.load %arg6[%c0, %c0_1] : memref<128x128xf32, #tpu.memory_space<vmem>>, vector<128x128xf32>
    %c0_2 = arith.constant 0 : index
    %c0_3 = arith.constant 0 : index
    %4 = vector.load %arg2[%c0_2, %c0_3] : memref<128x128xbf16, #tpu.memory_space<vmem>>, vector<128x128xbf16>
    %c0_4 = arith.constant 0 : index
    %c0_5 = arith.constant 0 : index
    %5 = vector.load %arg3[%c0_4, %c0_5] : memref<128x128xbf16, #tpu.memory_space<vmem>>, vector<128x128xbf16>
    %cst = arith.constant dense<0.000000e+00> : vector<128x128xf32>
    %6 = tpu.matmul %4, %5, %cst {dimension_numbers = #tpu.dot_dimension_numbers<[1], [0], [0], [1], [0, 0, 1, 1], [], []>} : vector<128x128xbf16>, vector<128x128xbf16>, vector<128x128xf32> -> vector<128x128xf32>
    %7 = arith.addf %3, %6 : vector<128x128xf32>
    %c0_6 = arith.constant 0 : index
    %c0_7 = arith.constant 0 : index
    %8 = vector.load %arg6[%c0_6, %c0_7] : memref<128x128xf32, #tpu.memory_space<vmem>>, vector<128x128xf32>
    tpu.vector_store %arg6[%c0_6, %c0_7], %7 {strides = array<i32>} : memref<128x128xf32, #tpu.memory_space<vmem>>, vector<128x128xf32>,
    %c0_i32_8 = arith.constant 0 : i32
    %9 = arith.cmpi eq, %arg1, %c0_i32_8 : i32
    %10 = arith.extui %9 : i1 to i32
    %c0_i32_9 = arith.constant 0 : i32
    %11 = arith.cmpi ne, %10, %c0_i32_9 : i32
    scf.if %11 {
      %c0_10 = arith.constant 0 : index
      %c0_11 = arith.constant 0 : index
      %12 = vector.load %arg6[%c0_10, %c0_11] : memref<128x128xf32, #tpu.memory_space<vmem>>, vector<128x128xf32>
      %c0_12 = arith.constant 0 : index
      %c0_13 = arith.constant 0 : index
      %13 = vector.load %arg4[%c0_12, %c0_13] : memref<1x128xf32, #tpu.memory_space<vmem>>, vector<1x128xf32>
      %14 = vector.broadcast %13 : vector<1x128xf32> to vector<128x128xf32>
      %15 = arith.addf %12, %14 : vector<128x128xf32>
      %cst_14 = arith.constant 0.000000e+00 : f32
      %16 = vector.broadcast %cst_14 : f32 to vector<128x128xf32>
      %17 = arith.maximumf %15, %16 : vector<128x128xf32>
      %18 = arith.truncf %17 : vector<128x128xf32> to vector<128x128xbf16>
      %c0_15 = arith.constant 0 : index
      %c0_16 = arith.constant 0 : index
      %19 = vector.load %arg5[%c0_15, %c0_16] : memref<128x128xbf16, #tpu.memory_space<vmem>>, vector<128x128xbf16>
      tpu.vector_store %arg5[%c0_15, %c0_16], %18 {strides = array<i32>} : memref<128x128xbf16, #tpu.memory_space<vmem>>, vector<128x128xbf16>,
    } else {
    }
    return
  }
  func.func @transform_0(%arg0: i32, %arg1: i32) -> (i32, i32) {
    %c0_i32 = arith.constant 0 : i32
    return %arg0, %arg1 : i32, i32
  }
  func.func @transform_1(%arg0: i32, %arg1: i32) -> (i32, i32) {
    %c0_i32 = arith.constant 0 : i32
    %c0_i32_0 = arith.constant 0 : i32
    return %arg1, %c0_i32 : i32, i32
  }
  func.func @transform_2(%arg0: i32, %arg1: i32) -> (i32, i32) {
    %c0_i32 = arith.constant 0 : i32
    %c0_i32_0 = arith.constant 0 : i32
    %c0_i32_1 = arith.constant 0 : i32
    return %c0_i32, %c0_i32_0 : i32, i32
  }
  func.func @transform_3(%arg0: i32, %arg1: i32) -> (i32, i32) {
    %c0_i32 = arith.constant 0 : i32
    %c0_i32_0 = arith.constant 0 : i32
    return %arg0, %c0_i32 : i32, i32
  }
}

</mosaic_0001>

<llo_original>
// kernel: tpu_custom_call.1
$region0: #{tpu_custom_call.1}
  #allocation0 [shape = 'u32[]', space=smem, size = 0x4, offset = 0x4, fixed_abs, tag = 'smem constant byte address 0x4 - core index']
  #allocation1 [shape = 'u32[72,128]{1,0:T(1,128)}', space=vmem, size = 0x9000, scoped, tag = 'internal scratch']
  #allocation2 [shape = 'f32[128,128]{1,0:T(8,128)}', space=vmem, size = 0x10000, scoped, tag = 'scratch operand']
  %s0 = inlined_call_operand.hbm [shape: bf16[128,128], index: 0, kind: input, shape index: {}]
  %s1 = inlined_call_operand.hbm [shape: bf16[128,128], index: 1, kind: input, shape index: {}]
  %s2 = inlined_call_operand.vmem [shape: f32[1,128], index: 2, kind: input, shape index: {}]
  %s3 = inlined_call_operand.hbm [shape: bf16[128,128], index: 3, kind: output, shape index: {}]
  %s4 = sld [smem:[#allocation0]]
  $region38: #{tpu_custom_call.1} parent=0
    _
  %s6 = ssub.s32 1, %s4
  %s7 = scalar_select 0, %s6, %s4
  $region1: #{tpu_custom_call.1} parent=0
    #allocation3 [shape = 'u8[32768]{0}', space=vmem, size = 0x8000, scoped, tag = 'input window, operand 0, single buffered']
    #allocation4 [shape = 's32[1]{0}', space=sflag, size = 0x4, scoped, tag = 'scoped memory for tpu_custom_call.1']
    #allocation5 [shape = 's32[1]{0}', space=sflag, size = 0x4, scoped, tag = 'scoped memory for tpu_custom_call.1']
    #allocation6 [shape = 'u8[32768]{0}', space=vmem, size = 0x8000, scoped, tag = 'input window, operand 1, single buffered']
    #allocation7 [shape = 's32[1]{0}', space=sflag, size = 0x4, scoped, tag = 'scoped memory for tpu_custom_call.1']
    #allocation8 [shape = 'u8[32768]{0}', space=vmem, size = 0x8000, scoped, tag = 'output window, operand 0, single buffered']
    %8 = vsyncpa [#allocation4], 0
    %9 = vsyncpa [#allocation7], 0
    %10 = vsyncpa [#allocation5], 0
    // Predicated region
    $region2: #{tpu_custom_call.1} parent=1 // pred_check
      _
    $region3: #{tpu_custom_call.1} parent=1 // pred_check_branch
      %12 = sbr.rel (0) target = $region5
    $region4: #{tpu_custom_call.1} parent=1 // pred_region
      %14 = vsyncadd [#allocation4], 0
      %s15 = sshll.u32 %s0, 4
      %s16 = int_to_ptr.hbm [resolvable:$true] %s15
      %s17 = sshll.u32 [#allocation3], 4
      %s18 = int_to_ptr.vmem [resolvable:$true] %s17
      %23 = dma.hbm_to_vmem [thread:$0]  %s16, 1024, %s18, [#allocation4], 64, 64, 4
    $region5: #{tpu_custom_call.1} parent=1 // pred_fallthru
      _
    // Predicated region
    $region6: #{tpu_custom_call.1} parent=1 // pred_check
      _
    $region7: #{tpu_custom_call.1} parent=1 // pred_check_branch
      %25 = sbr.rel (0) target = $region9
    $region8: #{tpu_custom_call.1} parent=1 // pred_region
      %27 = vsyncadd [#allocation7], 0
      %s28 = sshll.u32 %s1, 4
      %s29 = int_to_ptr.hbm [resolvable:$true] %s28
      %s30 = sshll.u32 [#allocation6], 4
      %s31 = int_to_ptr.vmem [resolvable:$true] %s30
      %36 = dma.hbm_to_vmem [thread:$0]  %s29, 1024, %s31, [#allocation7], 64, 64, 4
    $region9: #{tpu_custom_call.1} parent=1 // pred_fallthru
      _
    // Predicated region
    $region10: #{tpu_custom_call.1} parent=1 // pred_check
      _
    $region11: #{tpu_custom_call.1} parent=1 // pred_check_branch
      %38 = sbr.rel (0) target = $region13
    $region12: #{tpu_custom_call.1} parent=1 // pred_region
      _
    $region13: #{tpu_custom_call.1} parent=1 // pred_fallthru
      _
    // Predicated region
    $region14: #{tpu_custom_call.1} parent=1 // pred_check
      _
    $region15: #{tpu_custom_call.1} parent=1 // pred_check_branch
      %40 = sbr.rel (0) target = $region17
    $region16: #{tpu_custom_call.1} parent=1 // pred_region
      %42 = dma.done [#allocation4], 1024
    $region17: #{tpu_custom_call.1} parent=1 // pred_fallthru
      _
    // Predicated region
    $region18: #{tpu_custom_call.1} parent=1 // pred_check
      _
    $region19: #{tpu_custom_call.1} parent=1 // pred_check_branch
      %44 = sbr.rel (0) target = $region21
    $region20: #{tpu_custom_call.1} parent=1 // pred_region
      %46 = dma.done [#allocation7], 1024
    $region21: #{tpu_custom_call.1} parent=1 // pred_fallthru
      _
    %p47 = scmp.eq.s32.totalorder 0, 0
    // Predicated region
    $region22: #{tpu_custom_call.1} parent=1 // pred_check
      %p48 = pneg %p47
    $region23: #{tpu_custom_call.1} parent=1 // pred_check_branch
      %50 = sbr.rel (%p48) target = $region25
    $region24: #{tpu_custom_call.1} parent=1 // pred_region
      %51 = vst [vmem:[#allocation2] sm:$0xff] 0.0
      %52 = vst [vmem:[#allocation2 + $0x8] sm:$0xff] 0.0
      %53 = vst [vmem:[#allocation2 + $0x10] sm:$0xff] 0.0
      %54 = vst [vmem:[#allocation2 + $0x18] sm:$0xff] 0.0
      %55 = vst [vmem:[#allocation2 + $0x20] sm:$0xff] 0.0
      %56 = vst [vmem:[#allocation2 + $0x28] sm:$0xff] 0.0
      %57 = vst [vmem:[#allocation2 + $0x30] sm:$0xff] 0.0
      %58 = vst [vmem:[#allocation2 + $0x38] sm:$0xff] 0.0
      %59 = vst [vmem:[#allocation2 + $0x40] sm:$0xff] 0.0
      %60 = vst [vmem:[#allocation2 + $0x48] sm:$0xff] 0.0
      %61 = vst [vmem:[#allocation2 + $0x50] sm:$0xff] 0.0
      %62 = vst [vmem:[#allocation2 + $0x58] sm:$0xff] 0.0
      %63 = vst [vmem:[#allocation2 + $0x60] sm:$0xff] 0.0
      %64 = vst [vmem:[#allocation2 + $0x68] sm:$0xff] 0.0
      %65 = vst [vmem:[#allocation2 + $0x70] sm:$0xff] 0.0
      %66 = vst [vmem:[#allocation2 + $0x78] sm:$0xff] 0.0
    $region25: #{tpu_custom_call.1} parent=1 // pred_fallthru
      _
    %v67 = vld [vmem:[#allocation2] sm:$0xff]
    %v68 = vld [vmem:[#allocation2 + $0x8] sm:$0xff]
    %v69 = vld [vmem:[#allocation2 + $0x10] sm:$0xff]
    %v70 = vld [vmem:[#allocation2 + $0x18] sm:$0xff]
    %v71 = vld [vmem:[#allocation2 + $0x20] sm:$0xff]
    %v72 = vld [vmem:[#allocation2 + $0x28] sm:$0xff]
    %v73 = vld [vmem:[#allocation2 + $0x30] sm:$0xff]
    %v74 = vld [vmem:[#allocation2 + $0x38] sm:$0xff]
    %v75 = vld [vmem:[#allocation2 + $0x40] sm:$0xff]
    %v76 = vld [vmem:[#allocation2 + $0x48] sm:$0xff]
    %v77 = vld [vmem:[#allocation2 + $0x50] sm:$0xff]
    %v78 = vld [vmem:[#allocation2 + $0x58] sm:$0xff]
    %v79 = vld [vmem:[#allocation2 + $0x60] sm:$0xff]
    %v80 = vld [vmem:[#allocation2 + $0x68] sm:$0xff]
    %v81 = vld [vmem:[#allocation2 + $0x70] sm:$0xff]
    %v82 = vld [vmem:[#allocation2 + $0x78] sm:$0xff]
    %v83 = vld [vmem:[#allocation3] sm:$0xf]
    %v84 = vld [vmem:[#allocation3 + $0x4] sm:$0xf]
    %v85 = vld [vmem:[#allocation3 + $0x8] sm:$0xf]
    %v86 = vld [vmem:[#allocation3 + $0xc] sm:$0xf]
    %v87 = vld [vmem:[#allocation3 + $0x10] sm:$0xf]
    %v88 = vld [vmem:[#allocation3 + $0x14] sm:$0xf]
    %v89 = vld [vmem:[#allocation3 + $0x18] sm:$0xf]
    %v90 = vld [vmem:[#allocation3 + $0x1c] sm:$0xf]
    %v91 = vld [vmem:[#allocation3 + $0x20] sm:$0xf]
    %v92 = vld [vmem:[#allocation3 + $0x24] sm:$0xf]
    %v93 = vld [vmem:[#allocation3 + $0x28] sm:$0xf]
    %v94 = vld [vmem:[#allocation3 + $0x2c] sm:$0xf]
    %v95 = vld [vmem:[#allocation3 + $0x30] sm:$0xf]
    %v96 = vld [vmem:[#allocation3 + $0x34] sm:$0xf]
    %v97 = vld [vmem:[#allocation3 + $0x38] sm:$0xf]
    %v98 = vld [vmem:[#allocation3 + $0x3c] sm:$0xf]
    %v99 = vld [vmem:[#allocation6] sm:$0xf]
    %v100 = vld [vmem:[#allocation6 + $0x4] sm:$0xf]
    %v101 = vld [vmem:[#allocation6 + $0x8] sm:$0xf]
    %v102 = vld [vmem:[#allocation6 + $0xc] sm:$0xf]
    %v103 = vld [vmem:[#allocation6 + $0x10] sm:$0xf]
    %v104 = vld [vmem:[#allocation6 + $0x14] sm:$0xf]
    %v105 = vld [vmem:[#allocation6 + $0x18] sm:$0xf]
    %v106 = vld [vmem:[#allocation6 + $0x1c] sm:$0xf]
    %v107 = vld [vmem:[#allocation6 + $0x20] sm:$0xf]
    %v108 = vld [vmem:[#allocation6 + $0x24] sm:$0xf]
    %v109 = vld [vmem:[#allocation6 + $0x28] sm:$0xf]
    %v110 = vld [vmem:[#allocation6 + $0x2c] sm:$0xf]
    %v111 = vld [vmem:[#allocation6 + $0x30] sm:$0xf]
    %v112 = vld [vmem:[#allocation6 + $0x34] sm:$0xf]
    %v113 = vld [vmem:[#allocation6 + $0x38] sm:$0xf]
    %v114 = vld [vmem:[#allocation6 + $0x3c] sm:$0xf]
    %v131 = vunpack.c.l.b16 %v83
    %v132 = vunpack.c.l.b16 %v84
    %v133 = vunpack.c.l.b16 %v85
    %v134 = vunpack.c.l.b16 %v86
    %v135 = vunpack.c.l.b16 %v87
    %v136 = vunpack.c.l.b16 %v88
    %v137 = vunpack.c.l.b16 %v89
    %v138 = vunpack.c.l.b16 %v90
    %v139 = vunpack.c.l.b16 %v91
    %v140 = vunpack.c.l.b16 %v92
    %v141 = vunpack.c.l.b16 %v93
    %v142 = vunpack.c.l.b16 %v94
    %v143 = vunpack.c.l.b16 %v95
    %v144 = vunpack.c.l.b16 %v96
    %v145 = vunpack.c.l.b16 %v97
    %v146 = vunpack.c.l.b16 %v98
    %v147 = vpack.c.b16 %v132, %v131
    %v148 = vpack.c.b16 %v134, %v133
    %v149 = vpack.c.b16 %v136, %v135
    %v150 = vpack.c.b16 %v138, %v137
    %v151 = vpack.c.b16 %v140, %v139
    %v152 = vpack.c.b16 %v142, %v141
    %v153 = vpack.c.b16 %v144, %v143
    %v154 = vpack.c.b16 %v146, %v145
    %v179 = vunpack.c.l.b16 %v99
    %v180 = vunpack.c.l.b16 %v100
    %v181 = vunpack.c.l.b16 %v101
    %v182 = vunpack.c.l.b16 %v102
    %v183 = vunpack.c.l.b16 %v103
    %v184 = vunpack.c.l.b16 %v104
    %v185 = vunpack.c.l.b16 %v105
    %v186 = vunpack.c.l.b16 %v106
    %v187 = vunpack.c.l.b16 %v107
    %v188 = vunpack.c.l.b16 %v108
    %v189 = vunpack.c.l.b16 %v109
    %v190 = vunpack.c.l.b16 %v110
    %v191 = vunpack.c.l.b16 %v111
    %v192 = vunpack.c.l.b16 %v112
    %v193 = vunpack.c.l.b16 %v113
    %v194 = vunpack.c.l.b16 %v114
    %v195 = vpack.c.b16 %v180, %v179
    %v196 = vpack.c.b16 %v182, %v181
    %v197 = vpack.c.b16 %v184, %v183
    %v198 = vpack.c.b16 %v186, %v185
    %v199 = vpack.c.b16 %v188, %v187
    %v200 = vpack.c.b16 %v190, %v189
    %v201 = vpack.c.b16 %v192, %v191
    %v202 = vpack.c.b16 %v194, %v193
    %211 = vmatpush.bf16.msra.mxu0 %v202
    %212 = vmatpush.bf16.msra.mxu0 %v201
    %213 = vmatpush.bf16.msra.mxu0 %v200
    %214 = vmatpush.bf16.msra.mxu0 %v199
    %215 = vmatpush.bf16.msra.mxu0 %v198
    %216 = vmatpush.bf16.msra.mxu0 %v197
    %217 = vmatpush.bf16.msra.mxu0 %v196
    %218 = vmatpush.bf16.msra.mxu0 %v195
    %219 = vmatmul.bf16.gmra.mxu0 %v147
    %v220 = vpop.f32.mrf.mxu0
    %v221 = vadd.f32 0.0, %v220
    %v222 = vpop.f32.mrf.mxu0
    %v223 = vadd.f32 0.0, %v222
    %224 = vmatmul.bf16.gmra.mxu0 %v148
    %v225 = vpop.f32.mrf.mxu0
    %v226 = vadd.f32 0.0, %v225
    %v227 = vpop.f32.mrf.mxu0
    %v228 = vadd.f32 0.0, %v227
    %229 = vmatmul.bf16.gmra.mxu0 %v149
    %v230 = vpop.f32.mrf.mxu0
    %v231 = vadd.f32 0.0, %v230
    %v232 = vpop.f32.mrf.mxu0
    %v233 = vadd.f32 0.0, %v232
    %234 = vmatmul.bf16.gmra.mxu0 %v150
    %v235 = vpop.f32.mrf.mxu0
    %v236 = vadd.f32 0.0, %v235
    %v237 = vpop.f32.mrf.mxu0
    %v238 = vadd.f32 0.0, %v237
    %239 = vmatmul.bf16.gmra.mxu0 %v151
    %v240 = vpop.f32.mrf.mxu0
    %v241 = vadd.f32 0.0, %v240
    %v242 = vpop.f32.mrf.mxu0
    %v243 = vadd.f32 0.0, %v242
    %244 = vmatmul.bf16.gmra.mxu0 %v152
    %v245 = vpop.f32.mrf.mxu0
    %v246 = vadd.f32 0.0, %v245
    %v247 = vpop.f32.mrf.mxu0
    %v248 = vadd.f32 0.0, %v247
    %249 = vmatmul.bf16.gmra.mxu0 %v153
    %v250 = vpop.f32.mrf.mxu0
    %v251 = vadd.f32 0.0, %v250
    %v252 = vpop.f32.mrf.mxu0
    %v253 = vadd.f32 0.0, %v252
    %254 = vmatmul.bf16.gmra.mxu0 %v154
    %v255 = vpop.f32.mrf.mxu0
    %v256 = vadd.f32 0.0, %v255
    %v257 = vpop.f32.mrf.mxu0
    %v258 = vadd.f32 0.0, %v257
    %259 = vdwg.mxu0
    %v260 = vadd.f32 %v67, %v221
    %v261 = vadd.f32 %v68, %v223
    %v262 = vadd.f32 %v69, %v226
    %v263 = vadd.f32 %v70, %v228
    %v264 = vadd.f32 %v71, %v231
    %v265 = vadd.f32 %v72, %v233
    %v266 = vadd.f32 %v73, %v236
    %v267 = vadd.f32 %v74, %v238
    %v268 = vadd.f32 %v75, %v241
    %v269 = vadd.f32 %v76, %v243
    %v270 = vadd.f32 %v77, %v246
    %v271 = vadd.f32 %v78, %v248
    %v272 = vadd.f32 %v79, %v251
    %v273 = vadd.f32 %v80, %v253
    %v274 = vadd.f32 %v81, %v256
    %v275 = vadd.f32 %v82, %v258
    %276 = vst [vmem:[#allocation2] sm:$0xff] %v260
    %277 = vst [vmem:[#allocation2 + $0x8] sm:$0xff] %v261
    %278 = vst [vmem:[#allocation2 + $0x10] sm:$0xff] %v262
    %279 = vst [vmem:[#allocation2 + $0x18] sm:$0xff] %v263
    %280 = vst [vmem:[#allocation2 + $0x20] sm:$0xff] %v264
    %281 = vst [vmem:[#allocation2 + $0x28] sm:$0xff] %v265
    %282 = vst [vmem:[#allocation2 + $0x30] sm:$0xff] %v266
    %283 = vst [vmem:[#allocation2 + $0x38] sm:$0xff] %v267
    %284 = vst [vmem:[#allocation2 + $0x40] sm:$0xff] %v268
    %285 = vst [vmem:[#allocation2 + $0x48] sm:$0xff] %v269
    %286 = vst [vmem:[#allocation2 + $0x50] sm:$0xff] %v270
    %287 = vst [vmem:[#allocation2 + $0x58] sm:$0xff] %v271
    %288 = vst [vmem:[#allocation2 + $0x60] sm:$0xff] %v272
    %289 = vst [vmem:[#allocation2 + $0x68] sm:$0xff] %v273
    %290 = vst [vmem:[#allocation2 + $0x70] sm:$0xff] %v274
    %291 = vst [vmem:[#allocation2 + $0x78] sm:$0xff] %v275
    // Predicated region
    $region26: #{tpu_custom_call.1} parent=1 // pred_check
      %p292 = pneg %p47
    $region27: #{tpu_custom_call.1} parent=1 // pred_check_branch
      %294 = sbr.rel (%p292) target = $region29
    $region28: #{tpu_custom_call.1} parent=1 // pred_region
      %v295 = vld [vmem:[#allocation2] sm:$0xff]
      %v296 = vld [vmem:[#allocation2 + $0x8] sm:$0xff]
      %v297 = vld [vmem:[#allocation2 + $0x10] sm:$0xff]
      %v298 = vld [vmem:[#allocation2 + $0x18] sm:$0xff]
      %v299 = vld [vmem:[#allocation2 + $0x20] sm:$0xff]
      %v300 = vld [vmem:[#allocation2 + $0x28] sm:$0xff]
      %v301 = vld [vmem:[#allocation2 + $0x30] sm:$0xff]
      %v302 = vld [vmem:[#allocation2 + $0x38] sm:$0xff]
      %v303 = vld [vmem:[#allocation2 + $0x40] sm:$0xff]
      %v304 = vld [vmem:[#allocation2 + $0x48] sm:$0xff]
      %v305 = vld [vmem:[#allocation2 + $0x50] sm:$0xff]
      %v306 = vld [vmem:[#allocation2 + $0x58] sm:$0xff]
      %v307 = vld [vmem:[#allocation2 + $0x60] sm:$0xff]
      %v308 = vld [vmem:[#allocation2 + $0x68] sm:$0xff]
      %v309 = vld [vmem:[#allocation2 + $0x70] sm:$0xff]
      %v310 = vld [vmem:[#allocation2 + $0x78] sm:$0xff]
      %v311 = vld [vmem:[%s2] sm:$0x1]
      %v313 = vperm.slane %v311, 0
      %v315 = vadd.f32 %v295, %v313
      %v316 = vadd.f32 %v296, %v313
      %v317 = vadd.f32 %v297, %v313
      %v318 = vadd.f32 %v298, %v313
      %v319 = vadd.f32 %v299, %v313
      %v320 = vadd.f32 %v300, %v313
      %v321 = vadd.f32 %v301, %v313
      %v322 = vadd.f32 %v302, %v313
      %v323 = vadd.f32 %v303, %v313
      %v324 = vadd.f32 %v304, %v313
      %v325 = vadd.f32 %v305, %v313
      %v326 = vadd.f32 %v306, %v313
      %v327 = vadd.f32 %v307, %v313
      %v328 = vadd.f32 %v308, %v313
      %v329 = vadd.f32 %v309, %v313
      %v330 = vadd.f32 %v310, %v313
      %v331 = vmax.f32 %v315, 0.0
      %v332 = vmax.f32 %v316, 0.0
      %v333 = vmax.f32 %v317, 0.0
      %v334 = vmax.f32 %v318, 0.0
      %v335 = vmax.f32 %v319, 0.0
      %v336 = vmax.f32 %v320, 0.0
      %v337 = vmax.f32 %v321, 0.0
      %v338 = vmax.f32 %v322, 0.0
      %v339 = vmax.f32 %v323, 0.0
      %v340 = vmax.f32 %v324, 0.0
      %v341 = vmax.f32 %v325, 0.0
      %v342 = vmax.f32 %v326, 0.0
      %v343 = vmax.f32 %v327, 0.0
      %v344 = vmax.f32 %v328, 0.0
      %v345 = vmax.f32 %v329, 0.0
      %v346 = vmax.f32 %v330, 0.0
      %v347 = vpack.c.bf16 %v331, %v331
      %v348 = vpack.c.bf16 %v332, %v332
      %v349 = vpack.c.bf16 %v333, %v333
      %v350 = vpack.c.bf16 %v334, %v334
      %v351 = vpack.c.bf16 %v335, %v335
      %v352 = vpack.c.bf16 %v336, %v336
      %v353 = vpack.c.bf16 %v337, %v337
      %v354 = vpack.c.bf16 %v338, %v338
      %v355 = vpack.c.bf16 %v339, %v339
      %v356 = vpack.c.bf16 %v340, %v340
      %v357 = vpack.c.bf16 %v341, %v341
      %v358 = vpack.c.bf16 %v342, %v342
      %v359 = vpack.c.bf16 %v343, %v343
      %v360 = vpack.c.bf16 %v344, %v344
      %v361 = vpack.c.bf16 %v345, %v345
      %v362 = vpack.c.bf16 %v346, %v346
      %363 = vst [vmem:[#allocation8] sm:$0xf] %v347
      %364 = vst [vmem:[#allocation8 + $0x4] sm:$0xf] %v348
      %365 = vst [vmem:[#allocation8 + $0x8] sm:$0xf] %v349
      %366 = vst [vmem:[#allocation8 + $0xc] sm:$0xf] %v350
      %367 = vst [vmem:[#allocation8 + $0x10] sm:$0xf] %v351
      %368 = vst [vmem:[#allocation8 + $0x14] sm:$0xf] %v352
      %369 = vst [vmem:[#allocation8 + $0x18] sm:$0xf] %v353
      %370 = vst [vmem:[#allocation8 + $0x1c] sm:$0xf] %v354
      %371 = vst [vmem:[#allocation8 + $0x20] sm:$0xf] %v355
      %372 = vst [vmem:[#allocation8 + $0x24] sm:$0xf] %v356
      %373 = vst [vmem:[#allocation8 + $0x28] sm:$0xf] %v357
      %374 = vst [vmem:[#allocation8 + $0x2c] sm:$0xf] %v358
      %375 = vst [vmem:[#allocation8 + $0x30] sm:$0xf] %v359
      %376 = vst [vmem:[#allocation8 + $0x34] sm:$0xf] %v360
      %377 = vst [vmem:[#allocation8 + $0x38] sm:$0xf] %v361
      %378 = vst [vmem:[#allocation8 + $0x3c] sm:$0xf] %v362
    $region29: #{tpu_custom_call.1} parent=1 // pred_fallthru
      _
    // Predicated region
    $region30: #{tpu_custom_call.1} parent=1 // pred_check
      _
    $region31: #{tpu_custom_call.1} parent=1 // pred_check_branch
      %380 = sbr.rel (0) target = $region33
    $region32: #{tpu_custom_call.1} parent=1 // pred_region
      %382 = vsyncadd [#allocation5], 0
      %s383 = sshll.u32 [#allocation8], 4
      %s384 = int_to_ptr.vmem [resolvable:$true] %s383
      %s385 = sshll.u32 %s3, 4
      %s386 = int_to_ptr.hbm [resolvable:$true] %s385
      %391 = dma.vmem_to_hbm [thread:$0]  %s384, 1024, %s386, [#allocation5], 64, 64, 4
    $region33: #{tpu_custom_call.1} parent=1 // pred_fallthru
      _
    // Predicated region
    $region34: #{tpu_custom_call.1} parent=1 // pred_check
      _
    $region35: #{tpu_custom_call.1} parent=1 // pred_check_branch
      %393 = sbr.rel (0) target = $region37
    $region36: #{tpu_custom_call.1} parent=1 // pred_region
      %395 = dma.done [#allocation5], 1024
    $region37: #{tpu_custom_call.1} parent=1 // pred_fallthru
      _
    %396 = vsyncpa [#allocation4], 1
    %397 = vsyncpa [#allocation7], 1
    %398 = vsyncpa [#allocation5], 1

</llo_original>
